<compile_context>
chip_gen: v7x
topology: tpu7x:2x2x1
jax: 0.10.0
libtpu: 0.0.40
codegen_flags: <defaults>
</compile_context>

<pallas_src>
import functools

import jax
import jax.numpy as jnp
from jax.experimental import pallas as pl
from jax.experimental.pallas import tpu as pltpu


def _round_up(x, m):
    return ((x + m - 1) // m) * m


def nlinear_kernel(x_ref, w_ref, b_ref, o_ref, *, batch_tile, last_idx,
                   compute_dtype):
    # x_ref: (bt, S, C) f32        -- native input layout, no transposes needed
    # w_ref: (P, S)     compute    -- VMEM-resident (constant block index)
    # b_ref: (P, 1)     f32        -- VMEM-resident bias
    # o_ref: (bt, P, C) out dtype  -- native output layout
    w = w_ref[...]
    bias = b_ref[...]
    # Small static unroll over the batches of this tile (batch_tile <= 8).
    for b in range(batch_tile):
        xb = x_ref[b]                                   # (S, C) f32
        last = xb[last_idx:last_idx + 1, :]             # (1, C) last valid step
        xd = (xb - last).astype(compute_dtype)          # centered residual
        # MXU: (P, S) @ (S, C) -> (P, C), f32 accumulation.
        y = jnp.dot(w, xd, preferred_element_type=jnp.float32)
        y = y + bias + last                             # f32 epilogue
        o_ref[b] = y.astype(o_ref.dtype)


def _pick_batch_tile(B, S, C, P, out_itemsize, budget_bytes):
    """Largest batch tile that (double-buffered) fits the VMEM budget."""
    lanes_c = _round_up(C, 128)
    per_b = (_round_up(S, 8) * 4 + _round_up(P, 8) * out_itemsize) * lanes_c
    bt = int(max(1, budget_bytes // (2 * per_b)))
    bt = min(bt, 8)                       # cap the static in-kernel unroll
    if B >= 2:
        bt = min(bt, B // 2)              # keep >= 2 grid steps (v7x megacore)
    return max(1, min(bt, B))


def _estimate_vmem_bytes(bt, S, C, P, compute_itemsize, out_itemsize):
    lanes_c = _round_up(C, 128)
    lanes_s = _round_up(S, 128)
    x_blk = bt * _round_up(S, 8) * lanes_c * 4
    o_blk = bt * _round_up(P, 8) * lanes_c * out_itemsize
    w_blk = _round_up(P, 16) * lanes_s * compute_itemsize
    b_blk = _round_up(P, 8) * 128 * 4
    return 2 * (x_blk + o_blk + w_blk + b_blk)   # conservative: 2 buffers each


def nlinear_forward(x, weight, bias, *, compute_dtype=jnp.bfloat16,
                    out_dtype=None, vmem_budget_bytes=24 * 1024 * 1024):
    """NLinear forward, shared-Linear branch.

    x: (B, S, C) f32; weight: (P, S); bias: (P,)  ->  (B, P, C) out_dtype.
    out_dtype=None keeps the input dtype; pass jnp.bfloat16 to halve the
    output HBM stream if downstream tolerates it.
    """
    B, S, C = x.shape
    P = weight.shape[0]
    out_dtype = x.dtype if out_dtype is None else out_dtype
    out_itemsize = jnp.dtype(out_dtype).itemsize
    compute_itemsize = jnp.dtype(compute_dtype).itemsize

    bt = _pick_batch_tile(B, S, C, P, out_itemsize, vmem_budget_bytes)
    grid = (pl.cdiv(B, bt),)

    # Tiny wrapper-side casts only (no transposes, no pads).
    w = weight.astype(compute_dtype)                        # (P, S)
    b2 = bias.reshape(P, 1).astype(jnp.float32)             # (P, 1)

    # Explicit, generation-safe VMEM budget derived from the actual blocks
    # (>= 32 MiB floor is fine on v5e/v6e/v7x; never exceeds physical VMEM).
    est = _estimate_vmem_bytes(bt, S, C, P, compute_itemsize, out_itemsize)
    vmem_limit = int(min(100 * 1024 * 1024,
                         max(32 * 1024 * 1024, int(1.5 * est))))

    kernel = functools.partial(
        nlinear_kernel, batch_tile=bt, last_idx=S - 1,
        compute_dtype=compute_dtype)

    out = pl.pallas_call(
        kernel,
        out_shape=jax.ShapeDtypeStruct((B, P, C), out_dtype),
        grid_spec=pltpu.PrefetchScalarGridSpec(
            num_scalar_prefetch=0,
            grid=grid,
            in_specs=[
                # Last two block dims equal the full array dims -> legal
                # regardless of (8, 128) divisibility; no HBM padding needed.
                pl.BlockSpec((bt, S, C), lambda i: (i, 0, 0)),
                # Constant block index: weight/bias stay VMEM-resident across
                # grid steps (no re-DMA).  pipeline_mode=pl.Buffered(1) could
                # reclaim their second buffer; skipped to stay conservative.
                pl.BlockSpec((P, S), lambda i: (0, 0)),
                pl.BlockSpec((P, 1), lambda i: (0, 0)),
            ],
            out_specs=pl.BlockSpec((bt, P, C), lambda i: (i, 0, 0)),
        ),
        compiler_params=pltpu.CompilerParams(
            dimension_semantics=("parallel",),    # batch tiles split across TCs
            vmem_limit_bytes=vmem_limit,
        ),
    )(x, w, b2)
    return out


def nlinear_reference(x, weight, bias):
    # Pure-JAX reference matching the PyTorch forward exactly (f32).
    seq_last = x[:, -1:, :]                                   # (B, 1, C)
    xd = x - seq_last                                         # (B, S, C)
    y = jnp.einsum("bsc,ps->bpc", xd, weight) + bias[None, :, None]
    return y + seq_last


if __name__ == "__main__":
    # Small, deterministic config (individual=False branch).
    batch = 2
    seq_len = 8
    pred_len = 8
    channels = 4

    key = jax.random.PRNGKey(0)
    kx, kw, kb = jax.random.split(key, 3)

    x = jax.random.normal(kx, (batch, seq_len, channels), dtype=jnp.float32)

    # Deterministic init mimicking nn.Linear's U(-1/sqrt(in), 1/sqrt(in)).
    bound = 1.0 / (seq_len ** 0.5)
    weight = jax.random.uniform(
        kw, (pred_len, seq_len), minval=-bound, maxval=bound, dtype=jnp.float32
    )
    bias = jax.random.uniform(
        kb, (pred_len,), minval=-bound, maxval=bound, dtype=jnp.float32
    )

    ref = nlinear_reference(x, weight, bias)

    # bf16 MXU path (default) -- validate with a bf16-appropriate tolerance.
    out_bf16 = jax.block_until_ready(
        nlinear_forward(x, weight, bias, compute_dtype=jnp.bfloat16))
    assert out_bf16.shape == (batch, pred_len, channels)
    assert jnp.allclose(out_bf16, ref, atol=5e-2, rtol=5e-2), "bf16 mismatch"

    # f32 compute path -- tight-tolerance check of the fused kernel.
    out_f32 = jax.block_until_ready(
        nlinear_forward(x, weight, bias, compute_dtype=jnp.float32))
    assert out_f32.shape == (batch, pred_len, channels)
    assert jnp.allclose(out_f32, ref, atol=1e-5, rtol=1e-5), "f32 mismatch"

    # Optional bf16-output path (halves the output HBM stream).
    out_bf16o = jax.block_until_ready(
        nlinear_forward(x, weight, bias, compute_dtype=jnp.bfloat16,
                        out_dtype=jnp.bfloat16))
    assert out_bf16o.dtype == jnp.bfloat16
    assert jnp.allclose(out_bf16o.astype(jnp.float32), ref,
                        atol=5e-2, rtol=5e-2), "bf16-out mismatch"

    # TODO(synk): the `individual=True` branch (per-channel Linear weights) is
    # not implemented; the reference config uses the shared-Linear branch.
    print("KERNEL_OK")
</pallas_src>

<mosaic_0001>
module attributes {stable_mosaic.version = 11 : i64} {
  func.func @nlinear_kernel(%arg0: i32, %arg1: memref<1x8x4xf32, #tpu.memory_space<vmem>>, %arg2: memref<8x8xbf16, #tpu.memory_space<vmem>>, %arg3: memref<8x1xf32, #tpu.memory_space<vmem>>, %arg4: memref<1x8x4xf32, #tpu.memory_space<vmem>>) attributes {dimension_semantics = [#tpu.dimension_semantics<parallel>], iteration_bounds = array<i64: 2>, scalar_prefetch = 0 : i64, scratch_operands = 0 : i64, tpu.core_type = #tpu.core_type<tc>, window_params = [{transform_indices = @transform_0, window_bounds = array<i64: 1, 8, 4>}, {pipeline_mode = #tpu.pipeline_mode<synchronous>, transform_indices = @transform_1, window_bounds = array<i64: 8, 8>}, {pipeline_mode = #tpu.pipeline_mode<synchronous>, transform_indices = @transform_2, window_bounds = array<i64: 8, 1>}, {transform_indices = @transform_3, window_bounds = array<i64: 1, 8, 4>}]} {
    %c0 = arith.constant 0 : index
    %c0_0 = arith.constant 0 : index
    %0 = vector.load %arg2[%c0, %c0_0] : memref<8x8xbf16, #tpu.memory_space<vmem>>, vector<8x8xbf16>
    %c0_1 = arith.constant 0 : index
    %c0_2 = arith.constant 0 : index
    %1 = vector.load %arg3[%c0_1, %c0_2] : memref<8x1xf32, #tpu.memory_space<vmem>>, vector<8x1xf32>
    %c0_3 = arith.constant 0 : index
    %c0_4 = arith.constant 0 : index
    %c0_5 = arith.constant 0 : index
    %2 = vector.load %arg1[%c0_3, %c0_4, %c0_5] : memref<1x8x4xf32, #tpu.memory_space<vmem>>, vector<1x8x4xf32>
    %3 = vector.shape_cast %2 : vector<1x8x4xf32> to vector<8x4xf32>
    %4 = vector.extract_strided_slice %3 {offsets = [7, 0], sizes = [1, 4], strides = [1, 1]} : vector<8x4xf32> to vector<1x4xf32>
    %5 = vector.broadcast %4 : vector<1x4xf32> to vector<8x4xf32>
    %6 = arith.subf %3, %5 : vector<8x4xf32>
    %7 = arith.truncf %6 : vector<8x4xf32> to vector<8x4xbf16>
    %cst = arith.constant dense<0.000000e+00> : vector<8x4xf32>
    %8 = tpu.matmul %0, %7, %cst {dimension_numbers = #tpu.dot_dimension_numbers<[1], [0], [0], [1], [0, 0, 1, 1], [], []>} : vector<8x8xbf16>, vector<8x4xbf16>, vector<8x4xf32> -> vector<8x4xf32>
    %9 = vector.broadcast %1 : vector<8x1xf32> to vector<8x4xf32>
    %10 = arith.addf %8, %9 : vector<8x4xf32>
    %11 = vector.broadcast %4 : vector<1x4xf32> to vector<8x4xf32>
    %12 = arith.addf %10, %11 : vector<8x4xf32>
    %c0_6 = arith.constant 0 : index
    %c0_7 = arith.constant 0 : index
    %c0_8 = arith.constant 0 : index
    %13 = vector.load %arg4[%c0_6, %c0_7, %c0_8] : memref<1x8x4xf32, #tpu.memory_space<vmem>>, vector<1x8x4xf32>
    %14 = vector.shape_cast %13 : vector<1x8x4xf32> to vector<8x4xf32>
    %15 = vector.shape_cast %12 : vector<8x4xf32> to vector<1x8x4xf32>
    tpu.vector_store %arg4[%c0_6, %c0_7, %c0_8], %15 {strides = array<i32>} : memref<1x8x4xf32, #tpu.memory_space<vmem>>, vector<1x8x4xf32>,
    return
  }
  func.func @transform_0(%arg0: i32) -> (i32, i32, i32) {
    %c0_i32 = arith.constant 0 : i32
    %c0_i32_0 = arith.constant 0 : i32
    %c0_i32_1 = arith.constant 0 : i32
    return %arg0, %c0_i32, %c0_i32_0 : i32, i32, i32
  }
  func.func @transform_1(%arg0: i32) -> (i32, i32) {
    %c0_i32 = arith.constant 0 : i32
    %c0_i32_0 = arith.constant 0 : i32
    %c0_i32_1 = arith.constant 0 : i32
    return %c0_i32, %c0_i32_0 : i32, i32
  }
  func.func @transform_2(%arg0: i32) -> (i32, i32) {
    %c0_i32 = arith.constant 0 : i32
    %c0_i32_0 = arith.constant 0 : i32
    %c0_i32_1 = arith.constant 0 : i32
    return %c0_i32, %c0_i32_0 : i32, i32
  }
  func.func @transform_3(%arg0: i32) -> (i32, i32, i32) {
    %c0_i32 = arith.constant 0 : i32
    %c0_i32_0 = arith.constant 0 : i32
    %c0_i32_1 = arith.constant 0 : i32
    return %arg0, %c0_i32, %c0_i32_0 : i32, i32, i32
  }
}

</mosaic_0001>

<llo_original>
// kernel: tpu_custom_call.1
$region0: #{tpu_custom_call.1}
  #allocation0 [shape = 'u32[]', space=smem, size = 0x4, offset = 0x4, fixed_abs, tag = 'smem constant byte address 0x4 - core index']
  #allocation1 [shape = 'u32[144,128]{1,0:T(1,128)}', space=vmem, size = 0x12000, scoped, tag = 'internal scratch']
  %s0 = inlined_call_operand.vmem [shape: f32[2,8,4], index: 0, kind: input, shape index: {}]
  %s1 = inlined_call_operand.vmem [shape: bf16[8,8], index: 1, kind: input, shape index: {}]
  %s2 = inlined_call_operand.vmem [shape: f32[8,1], index: 2, kind: input, shape index: {}]
  %s3 = inlined_call_operand.vmem [shape: f32[2,8,4], index: 3, kind: output, shape index: {}]
  %s4 = sld [smem:[#allocation0]]
  $region45: #{tpu_custom_call.1} parent=0
    _
  %s6 = ssub.s32 1, %s4
  %s7 = scalar_select 0, %s6, %s4
  loop: start=0, step=1, limit=4
  $region2: #{tpu_custom_call.1} parent=0 // loop_pre_header
    _
  $region3: #{tpu_custom_call.1} parent=0 // loop_header
    %s9 = sphi 0, %s13
    %p10 = scmp.ge.s32.totalorder %s9, 4
    %s19 = sphi 0, %s21
    %s22 = sphi 0, %s19
    %s23 = sphi 0, %s22
    %s39 = sphi 0, %s23
    %s43 = sphi 0, %s43
    %s45 = sphi 0, %s43
    %s46 = sphi 0, %s45
    %s60 = sphi 0, %s46
    %s64 = sphi 0, %s64
    %s66 = sphi 0, %s64
    %s67 = sphi 0, %s66
    %s81 = sphi 0, %s67
    %s87 = sphi 0, %s89
    %s90 = sphi 0, %s87
    %s91 = sphi 0, %s90
    %s107 = sphi 0, %s91
  $region4: #{tpu_custom_call.1} parent=0 // loop_header_branch
    %12 = sbr.rel (%p10) target = $region8
  $region5: #{tpu_custom_call.1} parent=0 // loop_body
    %s14 = ssub.s32 %s9, 1
    %s15 = ssub.s32 %s9, 2
    %s16 = sadd.s32 %s9, 1
    %s17 = ssub.s32 %s9, %s16
    %p18 = scmp.eq.s32.totalorder %s17, 0
    %s20 = sadd.s32 %s19, 1
    %s21 = scalar_select %p18, %s19, %s20
    %p24 = pneg %p18
    %p25 = scmp.eq.s32.totalorder %s9, 1
    %p26 = por %p24, %p25
    %p27 = scmp.ne.s32.totalorder %s19, %s22
    %p28 = scmp.eq.s32.totalorder %s9, 0
    %p29 = por %p27, %p28
    %p30 = scmp.ne.s32.totalorder %s19, %s22
    %p31 = scmp.eq.s32.totalorder %s14, 1
    %p32 = por %p30, %p31
    %p33 = scmp.ne.s32.totalorder %s22, %s23
    %p34 = scmp.eq.s32.totalorder %s14, 0
    %p35 = por %p33, %p34
    %p36 = scmp.ne.s32.totalorder %s22, %s23
    %p37 = scmp.eq.s32.totalorder %s15, 1
    %p38 = por %p36, %p37
    %p40 = scmp.ne.s32.totalorder %s23, %s39
    %p41 = scmp.eq.s32.totalorder %s15, 0
    %p42 = por %p40, %p41
    %s44 = sadd.s32 %s43, 1
    %p47 = scmp.eq.s32.totalorder %s9, 1
    %p48 = scmp.ne.s32.totalorder %s43, %s45
    %p49 = scmp.eq.s32.totalorder %s9, 0
    %p50 = por %p48, %p49
    %p51 = scmp.ne.s32.totalorder %s43, %s45
    %p52 = scmp.eq.s32.totalorder %s14, 1
    %p53 = por %p51, %p52
    %p54 = scmp.ne.s32.totalorder %s45, %s46
    %p55 = scmp.eq.s32.totalorder %s14, 0
    %p56 = por %p54, %p55
    %p57 = scmp.ne.s32.totalorder %s45, %s46
    %p58 = scmp.eq.s32.totalorder %s15, 1
    %p59 = por %p57, %p58
    %p61 = scmp.ne.s32.totalorder %s46, %s60
    %p62 = scmp.eq.s32.totalorder %s15, 0
    %p63 = por %p61, %p62
    %s65 = sadd.s32 %s64, 1
    %p68 = scmp.eq.s32.totalorder %s9, 1
    %p69 = scmp.ne.s32.totalorder %s64, %s66
    %p70 = scmp.eq.s32.totalorder %s9, 0
    %p71 = por %p69, %p70
    %p72 = scmp.ne.s32.totalorder %s64, %s66
    %p73 = scmp.eq.s32.totalorder %s14, 1
    %p74 = por %p72, %p73
    %p75 = scmp.ne.s32.totalorder %s66, %s67
    %p76 = scmp.eq.s32.totalorder %s14, 0
    %p77 = por %p75, %p76
    %p78 = scmp.ne.s32.totalorder %s66, %s67
    %p79 = scmp.eq.s32.totalorder %s15, 1
    %p80 = por %p78, %p79
    %p82 = scmp.ne.s32.totalorder %s67, %s81
    %p83 = scmp.eq.s32.totalorder %s15, 0
    %p84 = por %p82, %p83
    %s85 = ssub.s32 %s9, %s16
    %p86 = scmp.eq.s32.totalorder %s85, 0
    %s88 = sadd.s32 %s87, 1
    %s89 = scalar_select %p86, %s87, %s88
    %p92 = pneg %p86
    %p93 = scmp.eq.s32.totalorder %s9, 1
    %p94 = por %p92, %p93
    %p95 = scmp.ne.s32.totalorder %s87, %s90
    %p96 = scmp.eq.s32.totalorder %s9, 0
    %p97 = por %p95, %p96
    %p98 = scmp.ne.s32.totalorder %s87, %s90
    %p99 = scmp.eq.s32.totalorder %s14, 1
    %p100 = por %p98, %p99
    %p101 = scmp.ne.s32.totalorder %s90, %s91
    %p102 = scmp.eq.s32.totalorder %s14, 0
    %p103 = por %p101, %p102
    %p104 = scmp.ne.s32.totalorder %s90, %s91
    %p105 = scmp.eq.s32.totalorder %s15, 1
    %p106 = por %p104, %p105
    %p108 = scmp.ne.s32.totalorder %s91, %s107
    %p109 = scmp.eq.s32.totalorder %s15, 0
    %p110 = por %p108, %p109
    %p111 = scmp.le.s32.totalorder 1, %s9
    %p112 = scmp.lt.s32.totalorder %s9, 3
    %p113 = pnand %p111, %p112
    %p114 = pneg %p113
    // Predicated region
    $region9: #{tpu_custom_call.1} parent=5 // pred_check
      _
    $region10: #{tpu_custom_call.1} parent=5 // pred_check_branch
      %116 = sbr.rel (%p113) target = $region12
    $region11: #{tpu_custom_call.1} parent=5 // pred_region
      %s117 = ssub.s32 %s9, 1
      // Predicated region
      $region13: #{tpu_custom_call.1} parent=11 // pred_check
        %p118 = pneg %p56
      $region14: #{tpu_custom_call.1} parent=11 // pred_check_branch
        %120 = sbr.rel (%p118) target = $region16
      $region15: #{tpu_custom_call.1} parent=11 // pred_region
        _
      $region16: #{tpu_custom_call.1} parent=11 // pred_fallthru
        _
      // Predicated region
      $region17: #{tpu_custom_call.1} parent=11 // pred_check
        %p121 = pneg %p77
      $region18: #{tpu_custom_call.1} parent=11 // pred_check_branch
        %123 = sbr.rel (%p121) target = $region20
      $region19: #{tpu_custom_call.1} parent=11 // pred_region
        _
      $region20: #{tpu_custom_call.1} parent=11 // pred_fallthru
        _
    $region12: #{tpu_custom_call.1} parent=5 // pred_fallthru
      _
    %p124 = scmp.lt.s32.totalorder %s9, 2
    // Predicated region
    $region21: #{tpu_custom_call.1} parent=5 // pred_check
      %p125 = pneg %p124
    $region22: #{tpu_custom_call.1} parent=5 // pred_check_branch
      %127 = sbr.rel (%p125) target = $region24
    $region23: #{tpu_custom_call.1} parent=5 // pred_region
      // Predicated region
      $region25: #{tpu_custom_call.1} parent=23 // pred_check
        %p128 = pneg %p29
      $region26: #{tpu_custom_call.1} parent=23 // pred_check_branch
        %130 = sbr.rel (%p128) target = $region28
      $region27: #{tpu_custom_call.1} parent=23 // pred_region
        %p131 = scmp.lt.s32.totalorder %s9, 1
        %s132 = scalar_select %p131, %s9, 1
        %s133 = smul.addr %s132, 8
        %s134 = scalar_lea.vmem %s0, %s133
      $region28: #{tpu_custom_call.1} parent=23 // pred_fallthru
        _
    $region24: #{tpu_custom_call.1} parent=5 // pred_fallthru
      _
    %p135 = scmp.le.s32.totalorder 1, %s9
    %p136 = scmp.lt.s32.totalorder %s9, 3
    %p137 = pnand %p135, %p136
    %p138 = pneg %p137
    // Predicated region
    $region29: #{tpu_custom_call.1} parent=5 // pred_check
      _
    $region30: #{tpu_custom_call.1} parent=5 // pred_check_branch
      %140 = sbr.rel (%p137) target = $region32
    $region31: #{tpu_custom_call.1} parent=5 // pred_region
      %s141 = ssub.s32 %s9, 1
      %p142 = scmp.lt.s32.totalorder %s14, 1
      %s143 = scalar_select %p142, %s14, 1
      %s144 = smul.addr %s143, 8
      %s145 = scalar_lea.vmem %s0, %s144
      %p146 = pneg %p35
      %p147 = pneg %p32
      %p148 = pneg %p56
      %p149 = pneg %p53
      %p150 = pneg %p77
      %p151 = pneg %p74
      %p152 = pneg %p103
      %p153 = pneg %p100
      %p154 = scmp.lt.s32.totalorder %s14, 1
      %s155 = scalar_select %p154, %s14, 1
      %s156 = smul.addr %s155, 8
      %s157 = scalar_lea.vmem %s3, %s156
      %p158 = scmp.lt.s32.totalorder %s14, 1
      %s159 = scalar_select %p158, %s14, 1
      %s160 = smul.addr %s159, 8
      %s161 = scalar_lea.vmem %s0, %s160
      %p162 = scmp.lt.s32.totalorder %s14, 1
      %s163 = scalar_select %p162, %s14, 1
      %s164 = smul.addr %s163, 8
      %s165 = scalar_lea.vmem %s3, %s164
      %v167 = vld [vmem:[%s1] sm:$0xf]
      %v168 = vld [vmem:[%s2] sm:$0xff]
      %v169 = vld [vmem:[%s161] sm:$0xff]
      %v170 = vlaneseq
      %v171 = vshrl.u32 %v170, 7
      %v172 = vsub.s32 7, %v171
      %v173 = vrot.slane %v169, %v172
      %v174 = vsub.f32 %v169, %v173
      %v175 = vpack.c.bf16 %v174, %v174
      %177 = vset.pattern.permute.xlu0 0
      %178 = vperm.xlu0 %177, %v168
      %v179 = vpop.permute.xlu0 %178
      %vm181 = vcmask 64512
      %v183 = vsel %vm181, %v167, 0
      %vm185 = vcmask 1043456
      %v187 = vsel %vm185, %v175, 0
      %189 = vmatprep.subr.bf16.mxu0 0
      %190 = vmatpush1.bf16.msra.mxu0 %v187
      %191 = vmatprep.subr.bf16.mxu0 0
      %192 = vmatpush1.bf16.msra.mxu0 0
      %193 = vmatprep.subr.bf16.mxu0 0
      %194 = vmatpush1.bf16.msra.mxu0 0
      %195 = vmatprep.subr.bf16.mxu0 0
      %196 = vmatpush1.bf16.msra.mxu0 0
      %197 = vmatprep.subr.bf16.mxu0 0
      %198 = vmatpush1.bf16.msra.mxu0 0
      %199 = vmatprep.subr.bf16.mxu0 0
      %200 = vmatpush1.bf16.msra.mxu0 0
      %201 = vmatprep.subr.bf16.mxu0 0
      %202 = vmatpush1.bf16.msra.mxu0 0
      %203 = vmatprep.subr.bf16.mxu0 0
      %204 = vmatpush1.bf16.msra.mxu0 0
      %205 = vmatprep.subr.bf16.mxu0 0
      %206 = vmatpush1.bf16.msra.mxu0 0
      %207 = vmatprep.subr.bf16.mxu0 0
      %208 = vmatpush1.bf16.msra.mxu0 0
      %209 = vmatprep.subr.bf16.mxu0 0
      %210 = vmatpush1.bf16.msra.mxu0 0
      %211 = vmatprep.subr.bf16.mxu0 0
      %212 = vmatpush1.bf16.msra.mxu0 0
      %213 = vmatprep.subr.bf16.mxu0 0
      %214 = vmatpush1.bf16.msra.mxu0 0
      %215 = vmatprep.subr.bf16.mxu0 0
      %216 = vmatpush1.bf16.msra.mxu0 0
      %217 = vmatprep.subr.bf16.mxu0 0
      %218 = vmatpush1.bf16.msra.mxu0 0
      %219 = vmatprep.subr.bf16.mxu0 0
      %220 = vmatpush1.bf16.msra.mxu0 0
      %221 = vmatprep.mubr.bf16.mxu0 0
      %222 = vmatmul.mubr.bf16.gmra.mrb[0].mxu0 %v183
      %v223 = vpop.f32.mrb[0].mxu0
      %v224 = vadd.f32 %v179, %v223
      %v225 = vpop.f32.mrb[0].mxu0
      %v226 = vpop.f32.mrb[0].mxu0
      %v227 = vpop.f32.mrb[0].mxu0
      %228 = vdwg.mxu0
      %v229 = vadd.f32 %v224, %v173
      %vm230 = vcmask 31744
      %231 = vst.msk [vmem:[%s165] sm:$0xff] %vm230, %v229
      %p232 = scmp.lt.s32.totalorder %s14, 1
      %s233 = scalar_select %p232, %s14, 1
      %s234 = smul.addr %s233, 8
      %s235 = scalar_lea.vmem %s3, %s234
      // Predicated region
      $region33: #{tpu_custom_call.1} parent=31 // pred_check
        %p236 = pneg %p100
      $region34: #{tpu_custom_call.1} parent=31 // pred_check_branch
        %238 = sbr.rel (%p236) target = $region36
      $region35: #{tpu_custom_call.1} parent=31 // pred_region
        _
      $region36: #{tpu_custom_call.1} parent=31 // pred_fallthru
        _
    $region32: #{tpu_custom_call.1} parent=5 // pred_fallthru
      _
    %p239 = scmp.le.s32.totalorder 2, %s9
    // Predicated region
    $region37: #{tpu_custom_call.1} parent=5 // pred_check
      %p240 = pneg %p239
    $region38: #{tpu_custom_call.1} parent=5 // pred_check_branch
      %242 = sbr.rel (%p240) target = $region40
    $region39: #{tpu_custom_call.1} parent=5 // pred_region
      %s243 = ssub.s32 %s9, 2
      // Predicated region
      $region41: #{tpu_custom_call.1} parent=39 // pred_check
        %p244 = pneg %p106
      $region42: #{tpu_custom_call.1} parent=39 // pred_check_branch
        %246 = sbr.rel (%p244) target = $region44
      $region43: #{tpu_custom_call.1} parent=39 // pred_region
        %p247 = scmp.lt.s32.totalorder %s15, 1
        %s248 = scalar_select %p247, %s15, 1
        %s249 = smul.addr %s248, 8
        %s250 = scalar_lea.vmem %s3, %s249
      $region44: #{tpu_custom_call.1} parent=39 // pred_fallthru
        _
    $region40: #{tpu_custom_call.1} parent=5 // pred_fallthru
      _
  $region6: #{tpu_custom_call.1} parent=0 // loop_footer
    %s13 = sadd.s32 1, %s9
  $region7: #{tpu_custom_call.1} parent=0 // loop_footer_branch
    %8 = sbr.rel target = $region3
  $region8: #{tpu_custom_call.1} parent=0 // loop_exit
    _

</llo_original>
